<compile_context>
chip_gen: v7x
topology: tpu7x:2x2x1
jax: 0.10.0
libtpu: 0.0.40
codegen_flags: <defaults>
</compile_context>

<pallas_src>
import functools

import jax
import jax.numpy as jnp
from jax.experimental import pallas as pl
from jax.experimental.pallas import tpu as pltpu


def _round_up(x, m):
    return (x + m - 1) // m * m


def _focal_loss_kernel(logits_ref, targets_ref, out_ref, *, gamma, n, block_rows):
    # logits_ref: (TN, C) float, targets_ref: (TN, 1) int32, out_ref: (1, 128) f32
    pid = pl.program_id(0)

    x = logits_ref[...].astype(jnp.float32)            # (TN, C)
    t = targets_ref[...]                                # (TN, 1) int32

    # valid-row mask: padded rows of the last (partial) tile contribute 0
    row = jax.lax.broadcasted_iota(jnp.int32, (x.shape[0], 1), 0)      # (TN, 1)
    valid = (pid * block_rows + row) < n                               # (TN, 1)

    # numerically stable log-softmax pieces
    m = jnp.max(x, axis=-1, keepdims=True)             # (TN, 1)
    z = x - m                                          # (TN, C)
    e = jnp.exp(z)                                     # (TN, C)
    sumexp = jnp.sum(e, axis=-1, keepdims=True)        # (TN, 1)   (e dead after this)
    lse = jnp.log(sumexp)                              # (TN, 1)

    # gather the target column via an iota == target mask (VPU friendly)
    col = jax.lax.broadcasted_iota(jnp.int32, x.shape, 1)              # (TN, C)
    hit = col == t                                                     # (TN, C)
    z_t = jnp.sum(jnp.where(hit, z, 0.0), axis=-1, keepdims=True)      # (TN, 1)

    ce = lse - z_t                                     # cross entropy per row
    pt = jnp.exp(z_t - lse)                            # = exp(-ce); per-row EUP op only
    q = 1.0 - pt

    gf = float(gamma)
    if gf == 2.0:
        mod = q * q                                    # free VALU multiply, no EUP pow
    elif gf.is_integer() and gf >= 0.0:
        mod = jnp.ones_like(q)
        for _ in range(int(gf)):
            mod = mod * q
    else:
        mod = q ** jnp.float32(gf)                     # general fallback

    # select (not multiply) so garbage rows' Inf/NaN never propagate
    f_loss = jnp.where(valid, mod * ce, 0.0)           # (TN, 1)
    partial = jnp.sum(f_loss, axis=0, keepdims=True)   # (1, 1)

    # lane-dense partial-sum block (wrapper reads lane 0 of each block)
    out_ref[...] = jnp.broadcast_to(partial, out_ref.shape)


def focal_loss(logits, targets, gamma=2.0, reduction="mean", max_block_rows=None):
    """Pallas TPU focal loss.

    logits: (N, C) float (f32 or bf16 -- bf16 halves HBM traffic, compute is f32),
    targets: (N,) int with values in [0, C).
    max_block_rows: optional row-tile cap (testing / tuning only).
    """
    n, c = logits.shape
    t2 = targets.reshape(n, 1).astype(jnp.int32)

    itemsize = jnp.dtype(logits.dtype).itemsize
    # sublane packing multiple: 8 for 32-bit, 16 for 16-bit dtypes
    row_mult = 8 if itemsize >= 4 else (16 if itemsize == 2 else 32)

    # Per-row VMEM bytes (drives tile size):
    #   * 2x double-buffered logits tile rows:                 2 * C * itemsize
    #   * 2x double-buffered (TN,1) int32 targets block, which
    #     pads to 128 lanes in VMEM:                           2 * 128 * 4
    #   * ~4 (TN,C)-sized f32 live temps in the body
    #     (x, z, e, hit/where):                                4 * C * 4
    bytes_per_row = 2 * c * itemsize + 2 * 128 * 4 + 4 * c * 4

    # ~16 MiB working-set budget: comfortably under the 32 MiB vmem limit below
    # on every generation (v7x has 64 MiB/TC physical; v5e/v6e have 128 MiB).
    budget = 16 << 20
    rows_by_vmem = max(row_mult, (budget // bytes_per_row) // row_mult * row_mult)

    tn = min(rows_by_vmem, _round_up(n, row_mult))
    # Keep >= 2 grid steps when possible so both v7x TensorCores get work.
    if n > row_mult:
        tn = min(tn, _round_up(pl.cdiv(n, 2), row_mult))
    if max_block_rows is not None:
        tn = min(tn, max_block_rows)
    tn = max(row_mult, tn // row_mult * row_mult)

    grid = pl.cdiv(n, tn)

    out = pl.pallas_call(
        functools.partial(_focal_loss_kernel, gamma=float(gamma), n=n, block_rows=tn),
        out_shape=jax.ShapeDtypeStruct((1, grid * 128), jnp.float32),
        grid=(grid,),
        in_specs=[
            pl.BlockSpec((tn, c), lambda i: (i, 0)),   # logits row tile
            pl.BlockSpec((tn, 1), lambda i: (i, 0)),   # targets row tile (lane-padded in VMEM)
        ],
        out_specs=pl.BlockSpec((1, 128), lambda i: (0, i)),   # per-block partial sum
        compiler_params=pltpu.CompilerParams(
            dimension_semantics=("parallel",),         # row tiles are independent
            # Sized to actual need, not the whole per-TC VMEM: 32 MiB leaves half of
            # v7x's 64 MiB for Mosaic scratch / pipeline buffers, and raises v5e's
            # 16 MiB default enough for the ~16 MiB working set above.
            vmem_limit_bytes=32 << 20,
        ),
    )(logits, t2)

    partials = out[0, ::128]                           # lane 0 of each (1,128) block
    total = jnp.sum(partials)
    if reduction == "mean":
        return total / jnp.float32(n)
    elif reduction == "sum":
        return total
    else:
        # TODO(synk): per-sample ('none') reduction would need an (N,)-shaped output path.
        raise NotImplementedError("reduction='none' not implemented in the Pallas kernel")


def _focal_loss_ref(logits, targets, gamma=2.0):
    # pure-JAX reference for a sanity check
    logp = jax.nn.log_softmax(logits.astype(jnp.float32), axis=-1)
    ce = -jnp.take_along_axis(logp, targets[:, None].astype(jnp.int32), axis=-1)[:, 0]
    pt = jnp.exp(-ce)
    return jnp.mean((1.0 - pt) ** gamma * ce)


if __name__ == "__main__":
    key = jax.random.PRNGKey(0)
    k_logits, k_targets, k_logits2, k_targets2 = jax.random.split(key, 4)

    # Primary small case: batch=8, num_classes=32 (single tile)
    N, C = 8, 32
    logits = jax.random.normal(k_logits, (N, C), dtype=jnp.float32)
    targets = jax.random.randint(k_targets, (N,), 0, C, dtype=jnp.int32)

    loss = focal_loss(logits, targets, gamma=2.0, reduction="mean")
    loss = jax.block_until_ready(loss)
    ref = _focal_loss_ref(logits, targets, gamma=2.0)
    assert jnp.allclose(loss, ref, rtol=1e-5, atol=1e-5), (loss, ref)

    # Secondary case: multiple grid blocks + a padded/masked partial last tile
    N2, C2 = 50, 32
    logits2 = jax.random.normal(k_logits2, (N2, C2), dtype=jnp.float32)
    targets2 = jax.random.randint(k_targets2, (N2,), 0, C2, dtype=jnp.int32)

    loss2 = focal_loss(logits2, targets2, gamma=2.0, reduction="mean", max_block_rows=16)
    loss2 = jax.block_until_ready(loss2)
    ref2 = _focal_loss_ref(logits2, targets2, gamma=2.0)
    assert jnp.allclose(loss2, ref2, rtol=1e-5, atol=1e-5), (loss2, ref2)

    # Tertiary case: default (budget-driven) tiling with >= 2 parallel grid steps
    N3, C3 = 50, 32
    loss3 = focal_loss(logits2, targets2, gamma=2.0, reduction="mean")
    loss3 = jax.block_until_ready(loss3)
    assert jnp.allclose(loss3, ref2, rtol=1e-5, atol=1e-5), (loss3, ref2)

    print("KERNEL_OK")
</pallas_src>

<mosaic_0001>
module attributes {stable_mosaic.version = 11 : i64} {
  func.func @_focal_loss_kernel(%arg0: i32, %arg1: memref<8x32xf32, #tpu.memory_space<vmem>>, %arg2: memref<8x1xi32, #tpu.memory_space<vmem>>, %arg3: memref<1x128xf32, #tpu.memory_space<vmem>>) attributes {dimension_semantics = [#tpu.dimension_semantics<parallel>], iteration_bounds = array<i64: 1>, scalar_prefetch = 0 : i64, scratch_operands = 0 : i64, tpu.core_type = #tpu.core_type<tc>, window_params = [{transform_indices = @transform_0, window_bounds = array<i64: 8, 32>}, {transform_indices = @transform_1, window_bounds = array<i64: 8, 1>}, {transform_indices = @transform_2, window_bounds = array<i64: 1, 128>}]} {
    %c0 = arith.constant 0 : index
    %c0_0 = arith.constant 0 : index
    %0 = vector.load %arg1[%c0, %c0_0] : memref<8x32xf32, #tpu.memory_space<vmem>>, vector<8x32xf32>
    %c0_1 = arith.constant 0 : index
    %c0_2 = arith.constant 0 : index
    %1 = vector.load %arg2[%c0_1, %c0_2] : memref<8x1xi32, #tpu.memory_space<vmem>>, vector<8x1xi32>
    %2 = tpu.iota {dimensions = array<i32: 0>} : vector<8x1xi32>
    %c8_i32 = arith.constant 8 : i32
    %3 = arith.muli %arg0, %c8_i32 : i32
    %4 = vector.broadcast %3 : i32 to vector<8x1xi32>
    %5 = arith.addi %4, %2 : vector<8x1xi32>
    %c8_i32_3 = arith.constant 8 : i32
    %6 = vector.broadcast %c8_i32_3 : i32 to vector<8x1xi32>
    %7 = arith.cmpi slt, %5, %6 : vector<8x1xi32>
    %cst = arith.constant dense<0xFF800000> : vector<8xf32>
    %8 = vector.multi_reduction <maximumf>, %0, %cst [1] : vector<8x32xf32> to vector<8xf32>
    %9 = vector.shape_cast %8 : vector<8xf32> to vector<8x1xf32>
    %10 = vector.broadcast %9 : vector<8x1xf32> to vector<8x32xf32>
    %11 = arith.subf %0, %10 : vector<8x32xf32>
    %12 = math.exp %11 : vector<8x32xf32>
    %cst_4 = arith.constant dense<0.000000e+00> : vector<8xf32>
    %13 = vector.multi_reduction <add>, %12, %cst_4 [1] : vector<8x32xf32> to vector<8xf32>
    %14 = vector.shape_cast %13 : vector<8xf32> to vector<8x1xf32>
    %15 = math.log %14 : vector<8x1xf32>
    %16 = tpu.iota {dimensions = array<i32: 1>} : vector<8x32xi32>
    %17 = vector.broadcast %1 : vector<8x1xi32> to vector<8x32xi32>
    %18 = arith.cmpi eq, %16, %17 : vector<8x32xi32>
    %cst_5 = arith.constant 0.000000e+00 : f32
    %19 = vector.broadcast %cst_5 : f32 to vector<8x32xf32>
    %20 = arith.select %18, %11, %19 : vector<8x32xi1>, vector<8x32xf32>
    %cst_6 = arith.constant dense<0.000000e+00> : vector<8xf32>
    %21 = vector.multi_reduction <add>, %20, %cst_6 [1] : vector<8x32xf32> to vector<8xf32>
    %22 = vector.shape_cast %21 : vector<8xf32> to vector<8x1xf32>
    %23 = arith.subf %15, %22 : vector<8x1xf32>
    %24 = arith.subf %22, %15 : vector<8x1xf32>
    %25 = math.exp %24 : vector<8x1xf32>
    %cst_7 = arith.constant 1.000000e+00 : f32
    %26 = vector.broadcast %cst_7 : f32 to vector<8x1xf32>
    %27 = arith.subf %26, %25 : vector<8x1xf32>
    %28 = arith.mulf %27, %27 : vector<8x1xf32>
    %29 = arith.mulf %28, %23 : vector<8x1xf32>
    %cst_8 = arith.constant 0.000000e+00 : f32
    %30 = vector.broadcast %cst_8 : f32 to vector<8x1xf32>
    %31 = arith.select %7, %29, %30 : vector<8x1xi1>, vector<8x1xf32>
    %cst_9 = arith.constant dense<0.000000e+00> : vector<1xf32>
    %32 = vector.multi_reduction <add>, %31, %cst_9 [0] : vector<8x1xf32> to vector<1xf32>
    %33 = vector.shape_cast %32 : vector<1xf32> to vector<1x1xf32>
    %34 = vector.shape_cast %33 : vector<1x1xf32> to vector<1x1xf32>
    %35 = vector.broadcast %34 : vector<1x1xf32> to vector<1x128xf32>
    %c0_10 = arith.constant 0 : index
    %c0_11 = arith.constant 0 : index
    %36 = vector.load %arg3[%c0_10, %c0_11] : memref<1x128xf32, #tpu.memory_space<vmem>>, vector<1x128xf32>
    tpu.vector_store %arg3[%c0_10, %c0_11], %35 {strides = array<i32>} : memref<1x128xf32, #tpu.memory_space<vmem>>, vector<1x128xf32>,
    return
  }
  func.func @transform_0(%arg0: i32) -> (i32, i32) {
    %c0_i32 = arith.constant 0 : i32
    %c0_i32_0 = arith.constant 0 : i32
    return %arg0, %c0_i32 : i32, i32
  }
  func.func @transform_1(%arg0: i32) -> (i32, i32) {
    %c0_i32 = arith.constant 0 : i32
    %c0_i32_0 = arith.constant 0 : i32
    return %arg0, %c0_i32 : i32, i32
  }
  func.func @transform_2(%arg0: i32) -> (i32, i32) {
    %c0_i32 = arith.constant 0 : i32
    %c0_i32_0 = arith.constant 0 : i32
    return %c0_i32, %arg0 : i32, i32
  }
}

</mosaic_0001>

<llo_original>
// kernel: tpu_custom_call.1
$region0: #{tpu_custom_call.1}
  #allocation0 [shape = 'u32[]', space=smem, size = 0x4, offset = 0x4, fixed_abs, tag = 'smem constant byte address 0x4 - core index']
  #allocation1 [shape = 'u32[144,128]{1,0:T(1,128)}', space=vmem, size = 0x12000, scoped, tag = 'internal scratch']
  %s0 = inlined_call_operand.vmem [shape: f32[8,32], index: 0, kind: input, shape index: {}]
  %s1 = inlined_call_operand.vmem [shape: s32[8,1], index: 1, kind: input, shape index: {}]
  %s2 = inlined_call_operand.hbm [shape: f32[1,128], index: 2, kind: output, shape index: {}]
  %s3 = sld [smem:[#allocation0]]
  $region18: #{tpu_custom_call.1} parent=0
    _
  %s5 = ssub.s32 1, %s3
  %s6 = scalar_select 0, %s5, %s3
  $region1: #{tpu_custom_call.1} parent=0
    #allocation2 [shape = 'u8[512]{0}', space=vmem, size = 0x400, scoped, tag = 'output window, operand 0, single buffered']
    #allocation3 [shape = 's32[1]{0}', space=sflag, size = 0x4, scoped, tag = 'scoped memory for tpu_custom_call.1']
    %7 = vsyncpa [#allocation3], 0
    // Predicated region
    $region2: #{tpu_custom_call.1} parent=1 // pred_check
      _
    $region3: #{tpu_custom_call.1} parent=1 // pred_check_branch
      %9 = sbr.rel (0) target = $region5
    $region4: #{tpu_custom_call.1} parent=1 // pred_region
      _
    $region5: #{tpu_custom_call.1} parent=1 // pred_fallthru
      _
    // Predicated region
    $region6: #{tpu_custom_call.1} parent=1 // pred_check
      _
    $region7: #{tpu_custom_call.1} parent=1 // pred_check_branch
      %11 = sbr.rel (0) target = $region9
    $region8: #{tpu_custom_call.1} parent=1 // pred_region
      _
    $region9: #{tpu_custom_call.1} parent=1 // pred_fallthru
      _
    %v12 = vld [vmem:[%s0] sm:$0xff]
    %v13 = vld [vmem:[%s1] sm:$0xff]
    %v14 = vlaneseq
    %v15 = vshrl.u32 %v14, 7
    %s16 = smul.u32 0, 8
    %v17 = vstv %s16
    %v18 = vadd.s32 %v17, %v15
    %vm19 = vcmp.lt.s32.totalorder %v18, 8
    %vm20 = vcmask 261120
    %v21 = vsel %vm20, %v12, -inf
    %22 = vmax.xlane.f32.xlu0 %v21
    %v23 = vpop.xlane.xlu0 %22
    %v24 = vsub.f32 %v12, %v23
    %v25 = vmul.f32 %v24, 1.442695
    %v26 = vpow.pop %v25
    %v27 = vsel %vm20, %v26, 0.0
    %28 = vadd.xlane.f32.xlu0 %v27
    %v29 = vpop.xlane.xlu0 %28
    %v30 = vlog2.pop %v29
    %v31 = vmul.f32 %v30, 0.6931472
    %v32 = vlaneseq
    %v33 = vand.u32 %v32, 127
    %34 = vset.pattern.permute.xlu0 0
    %35 = vperm.xlu0 %34, %v13
    %v36 = vpop.permute.xlu0 %35
    %vm37 = vcmp.eq.s32.totalorder %v33, %v36
    %v38 = vsel %vm37, %v24, 0.0
    %v39 = vsel %vm20, %v38, 0.0
    %40 = vadd.xlane.f32.xlu0 %v39
    %v41 = vpop.xlane.xlu0 %40
    %v42 = vsub.f32 %v31, %v41
    %v43 = vsub.f32 %v41, %v31
    %v44 = vmul.f32 %v43, 1.442695
    %v45 = vpow.pop %v44
    %v46 = vsub.f32 1.0, %v45
    %v47 = vmul.f32 %v46, %v46
    %v48 = vmul.f32 %v47, %v42
    %v49 = vsel %vm19, %v48, 0.0
    %v50 = vrot.slane %v49, 4
    %v51 = vadd.f32 %v49, %v50
    %v52 = vrot.slane %v51, 2
    %v53 = vadd.f32 %v51, %v52
    %v54 = vrot.slane %v53, 1
    %v55 = vadd.f32 %v53, %v54
    %56 = vst [vmem:[#allocation2] sm:$0x1] %v55
    // Predicated region
    $region10: #{tpu_custom_call.1} parent=1 // pred_check
      _
    $region11: #{tpu_custom_call.1} parent=1 // pred_check_branch
      %58 = sbr.rel (0) target = $region13
    $region12: #{tpu_custom_call.1} parent=1 // pred_region
      %s60 = ssub.s32 16, 16
      %61 = vsyncadd [#allocation3], %s60
      %s63 = sshll.u32 [#allocation2], 4
      %s64 = int_to_ptr.vmem [resolvable:$true] %s63
      %66 = dma.vmem_to_hbm [thread:$0]  %s64, 16, %s2, [#allocation3]
    $region13: #{tpu_custom_call.1} parent=1 // pred_fallthru
      _
    // Predicated region
    $region14: #{tpu_custom_call.1} parent=1 // pred_check
      _
    $region15: #{tpu_custom_call.1} parent=1 // pred_check_branch
      %68 = sbr.rel (0) target = $region17
    $region16: #{tpu_custom_call.1} parent=1 // pred_region
      %69 = dma.done [#allocation3], 16
    $region17: #{tpu_custom_call.1} parent=1 // pred_fallthru
      _
    %70 = vsyncpa [#allocation3], 1

</llo_original>
